<compile_context>
chip_gen: v5e
topology: v5e:2x2
jax: 0.10.0
libtpu: 0.0.40
codegen_flags: <defaults>
</compile_context>

<pallas_src>
import functools

import jax
import jax.numpy as jnp
from jax.experimental import pallas as pl
from jax.experimental.pallas import tpu as pltpu

LANE_PAD = 128  # lane-dense final output width (sliced back to 1 column in the wrapper)


# ----------------------------------------------------------------------------
# Fused Pallas kernel
# ----------------------------------------------------------------------------
def _masked_attention(s_dst_col, s_src_row, neg_mask, z_bf16):
    """Masked edge softmax (deferred normalization) + aggregation for one head.

    s_dst_col : [N, 1]  per-dst attention score (z[dst] . a_dst)
    s_src_row : [1, N]  per-src attention score (z[src] . a_src), already transposed
    neg_mask  : [N, N]  (adj - 1) * 1e9 additive mask (0 on edges, -1e9 off edges)
    z_bf16    : [N, D]  projected features (bf16, MXU operand)
    returns   : [N, D]  f32 aggregated output
    """
    e = s_dst_col + s_src_row                     # [N, N]
    e = jnp.maximum(e, 0.01 * e)                  # leaky_relu (slope 0.01), single vmax
    e = e + neg_mask                              # arithmetic mask (sole mask application)
    m = jnp.max(e, axis=1, keepdims=True)         # row max; safe: self loops guarantee an edge
    p = jnp.exp(e - m)                            # non-edges underflow to exactly 0 in f32
    denom = jnp.sum(p, axis=1, keepdims=True)     # >= 1 (self loop contributes exp(0))
    agg = jnp.dot(p.astype(jnp.bfloat16), z_bf16,
                  preferred_element_type=jnp.float32)       # [N, D], MXU
    # Deferred normalization: O(N*D) row scale instead of an O(N^2) alpha multiply.
    return agg * pl.reciprocal(denom, approx=True)          # EUP vrcp


def gat_fused_kernel(h_ref, mask_ref, w1_ref, a1_ref, w2_ref, a2_ref,
                     fcw_ref, fcb_ref, out_ref, *, num_heads, hidden_dim):
    neg_mask = mask_ref[...]                                 # [N, N] f32 additive mask
    h = h_ref[...].astype(jnp.bfloat16)                      # [N, D_in]

    # ---- layer 1: one wide projection for all heads ----
    z_all = jnp.dot(h, w1_ref[...],
                    preferred_element_type=jnp.float32).astype(jnp.bfloat16)  # [N, H*hidden]

    # All heads' scores in ONE matmul against the block-diagonal a-matrix.
    # Column 2*hd -> head hd src score, column 2*hd+1 -> head hd dst score.
    s_all = jnp.dot(z_all, a1_ref[...], preferred_element_type=jnp.float32)   # [N, 2H]
    s_all_t = jnp.transpose(s_all)                                            # [2H, N] (one XLU transpose)

    head_outs = []
    for hd in range(num_heads):                              # static tiny loop
        lo = hd * hidden_dim
        head_outs.append(_masked_attention(
            s_all[:, 2 * hd + 1:2 * hd + 2],                 # [N, 1] dst score
            s_all_t[2 * hd:2 * hd + 1, :],                   # [1, N] src score
            neg_mask,
            z_all[:, lo:lo + hidden_dim]))
    h1 = head_outs[0] if num_heads == 1 else jnp.concatenate(head_outs, axis=1)  # [N, H*hidden]

    # dropout(p=0.1) -> identity in eval mode; fused ELU epilogue.
    # (exp(x)-1 instead of expm1: Mosaic expm1 lowering not guaranteed; delta below tolerance.)
    h1 = jnp.where(h1 > 0.0, h1, jnp.exp(h1) - 1.0)
    h1_bf = h1.astype(jnp.bfloat16)

    # ---- layer 2: single head ----
    z2 = jnp.dot(h1_bf, w2_ref[...],
                 preferred_element_type=jnp.float32).astype(jnp.bfloat16)     # [N, out_dim]
    s2 = jnp.dot(z2, a2_ref[...], preferred_element_type=jnp.float32)         # [N, 2]
    s2_t = jnp.transpose(s2)                                                  # [2, N]
    h2 = _masked_attention(s2[:, 1:2], s2_t[0:1, :], neg_mask, z2)            # [N, out_dim] f32

    # dropout -> fc_1 -> dropout -> fc_2 folded host-side into one lane-dense matmul.
    out_ref[...] = jnp.dot(h2.astype(jnp.bfloat16), fcw_ref[...],
                           preferred_element_type=jnp.float32) + fcb_ref[...]  # [N, 128]


# ----------------------------------------------------------------------------
# Wrapper
# ----------------------------------------------------------------------------
def gat_forward(h, adj, params, *, num_heads, hidden_dim):
    N = h.shape[0]
    # Additive mask precomputed outside the kernel: the kernel sees ONE N x N operand.
    adj_mask = (adj - 1.0) * 1e9

    kernel = functools.partial(gat_fused_kernel,
                               num_heads=num_heads, hidden_dim=hidden_dim)
    vmem_spec = pl.BlockSpec(memory_space=pltpu.MemorySpace.VMEM)

    out_padded = pl.pallas_call(
        kernel,
        out_shape=jax.ShapeDtypeStruct((N, LANE_PAD), jnp.float32),
        in_specs=[vmem_spec] * 8,
        out_specs=vmem_spec,
        compiler_params=pltpu.CompilerParams(vmem_limit_bytes=64 * 1024 * 1024),
    )(h, adj_mask,
      params["w1"], params["a1_bd"], params["w2"], params["a2"],
      params["fc_w"], params["fc_b"])

    return out_padded[:, :1]                                 # back to the module's (N, 1)


# ----------------------------------------------------------------------------
# Deterministic parameter / input construction
# ----------------------------------------------------------------------------
def xavier_normal(key, shape, gain):
    # shape = (..., fan_in, fan_out) for our pre-transposed layout
    fan_in, fan_out = shape[-2], shape[-1]
    std = gain * jnp.sqrt(2.0 / (fan_in + fan_out))
    return std * jax.random.normal(key, shape, dtype=jnp.float32)


def build_params(key, in_dim, hidden_dim, out_dim, num_heads):
    gain = jnp.sqrt(2.0)  # nn.init.calculate_gain('relu')
    ks = jax.random.split(key, 8)
    # layer1 heads: fc weight [H, in, hidden], attn_fc weight [H, 2*hidden, 1]
    w1 = xavier_normal(ks[0], (num_heads, in_dim, hidden_dim), gain)
    a1 = xavier_normal(ks[1], (num_heads, 2 * hidden_dim, 1), gain)
    # layer2 single head
    w2 = xavier_normal(ks[2], (1, hidden_dim * num_heads, out_dim), gain)
    a2 = xavier_normal(ks[3], (1, 2 * out_dim, 1), gain)
    # fc_1 / fc_2 (synthetic deterministic init)
    fc1_w = 0.1 * jax.random.normal(ks[4], (out_dim, 8), dtype=jnp.float32)
    fc1_b = 0.1 * jax.random.normal(ks[5], (1, 8), dtype=jnp.float32)
    fc2_w = 0.1 * jax.random.normal(ks[6], (8, 1), dtype=jnp.float32)
    fc2_b = 0.1 * jax.random.normal(ks[7], (1, 1), dtype=jnp.float32)

    # ---- kernel-friendly layouts ----
    # w1 -> one wide [in_dim, H*hidden] so layer-1 projection is a single matmul.
    w1_wide = jnp.transpose(w1, (1, 0, 2)).reshape(in_dim, num_heads * hidden_dim)

    # Block-diagonal attention matrix [H*hidden, 2H]:
    #   column 2*hd   = head hd a_src, column 2*hd+1 = head hd a_dst
    a1_bd = jnp.zeros((num_heads * hidden_dim, 2 * num_heads), jnp.float32)
    for hd in range(num_heads):
        a_src = a1[hd, :hidden_dim, 0]
        a_dst = a1[hd, hidden_dim:, 0]
        rows = slice(hd * hidden_dim, (hd + 1) * hidden_dim)
        a1_bd = a1_bd.at[rows, 2 * hd].set(a_src)
        a1_bd = a1_bd.at[rows, 2 * hd + 1].set(a_dst)

    w2_flat = w2[0]                                                           # [H*hidden, out_dim]
    a2_cat = jnp.concatenate([a2[0, :out_dim, :], a2[0, out_dim:, :]], axis=1)  # [out_dim, 2]

    # Fold fc_1 -> fc_2 (dropout = identity, no activation between them), then pad the
    # folded weight / bias to 128 output lanes for a lane-dense final store.
    fc_w_fold = fc1_w @ fc2_w                                                 # [out_dim, 1]
    fc_b_fold = fc1_b @ fc2_w + fc2_b                                         # [1, 1]
    fc_w_pad = jnp.zeros((out_dim, LANE_PAD), jnp.float32).at[:, 0:1].set(fc_w_fold)
    fc_b_pad = jnp.zeros((1, LANE_PAD), jnp.float32).at[:, 0:1].set(fc_b_fold)

    # Weights stored bf16 (MXU-native operands, f32 accumulate in-kernel); bias stays f32.
    return {
        "w1": w1_wide.astype(jnp.bfloat16),
        "a1_bd": a1_bd.astype(jnp.bfloat16),
        "w2": w2_flat.astype(jnp.bfloat16),
        "a2": a2_cat.astype(jnp.bfloat16),
        "fc_w": fc_w_pad.astype(jnp.bfloat16),
        "fc_b": fc_b_pad,
    }


if __name__ == "__main__":
    N = 16          # number of graph nodes
    IN_DIM = 16
    HIDDEN_DIM = 8
    OUT_DIM = 8
    NUM_HEADS = 2

    key = jax.random.PRNGKey(0)
    k_h, k_adj, k_p = jax.random.split(key, 3)

    # node features
    h = jax.random.normal(k_h, (N, IN_DIM), dtype=jnp.float32)

    # random sparse directed graph + self loops (adj[dst, src])
    adj = (jax.random.uniform(k_adj, (N, N)) < 0.3).astype(jnp.float32)
    adj = jnp.maximum(adj, jnp.eye(N, dtype=jnp.float32))

    params = build_params(k_p, IN_DIM, HIDDEN_DIM, OUT_DIM, NUM_HEADS)

    fwd = jax.jit(functools.partial(gat_forward,
                                    num_heads=NUM_HEADS, hidden_dim=HIDDEN_DIM))
    out = fwd(h, adj, params)
    jax.block_until_ready(out)

    assert out.shape == (N, 1), out.shape
    assert bool(jnp.all(jnp.isfinite(out)))
    print("KERNEL_OK")
</pallas_src>

<mosaic_0001>
module attributes {stable_mosaic.version = 11 : i64} {
  func.func @gat_fused_kernel(%arg0: memref<16x16xf32, #tpu.memory_space<vmem>>, %arg1: memref<16x16xf32, #tpu.memory_space<vmem>>, %arg2: memref<16x16xbf16, #tpu.memory_space<vmem>>, %arg3: memref<16x4xbf16, #tpu.memory_space<vmem>>, %arg4: memref<16x8xbf16, #tpu.memory_space<vmem>>, %arg5: memref<8x2xbf16, #tpu.memory_space<vmem>>, %arg6: memref<8x128xbf16, #tpu.memory_space<vmem>>, %arg7: memref<1x128xf32, #tpu.memory_space<vmem>>, %arg8: memref<16x128xf32, #tpu.memory_space<vmem>>) attributes {dimension_semantics = [], scalar_prefetch = 0 : i64, scratch_operands = 0 : i64, tpu.core_type = #tpu.core_type<tc>} {
    %c0 = arith.constant 0 : index
    %c0_0 = arith.constant 0 : index
    %0 = vector.load %arg1[%c0, %c0_0] : memref<16x16xf32, #tpu.memory_space<vmem>>, vector<16x16xf32>
    %c0_1 = arith.constant 0 : index
    %c0_2 = arith.constant 0 : index
    %1 = vector.load %arg0[%c0_1, %c0_2] : memref<16x16xf32, #tpu.memory_space<vmem>>, vector<16x16xf32>
    %2 = arith.truncf %1 : vector<16x16xf32> to vector<16x16xbf16>
    %c0_3 = arith.constant 0 : index
    %c0_4 = arith.constant 0 : index
    %3 = vector.load %arg2[%c0_3, %c0_4] : memref<16x16xbf16, #tpu.memory_space<vmem>>, vector<16x16xbf16>
    %cst = arith.constant dense<0.000000e+00> : vector<16x16xf32>
    %4 = tpu.matmul %2, %3, %cst {dimension_numbers = #tpu.dot_dimension_numbers<[1], [0], [0], [1], [0, 0, 1, 1], [], []>} : vector<16x16xbf16>, vector<16x16xbf16>, vector<16x16xf32> -> vector<16x16xf32>
    %5 = arith.truncf %4 : vector<16x16xf32> to vector<16x16xbf16>
    %c0_5 = arith.constant 0 : index
    %c0_6 = arith.constant 0 : index
    %6 = vector.load %arg3[%c0_5, %c0_6] : memref<16x4xbf16, #tpu.memory_space<vmem>>, vector<16x4xbf16>
    %cst_7 = arith.constant dense<0.000000e+00> : vector<16x4xf32>
    %7 = tpu.matmul %5, %6, %cst_7 {dimension_numbers = #tpu.dot_dimension_numbers<[1], [0], [0], [1], [0, 0, 1, 1], [], []>} : vector<16x16xbf16>, vector<16x4xbf16>, vector<16x4xf32> -> vector<16x4xf32>
    %8 = tpu.transpose %7, [1, 0] : vector<16x4xf32> -> vector<4x16xf32>
    %9 = vector.extract_strided_slice %7 {offsets = [0, 1], sizes = [16, 1], strides = [1, 1]} : vector<16x4xf32> to vector<16x1xf32>
    %10 = vector.extract_strided_slice %8 {offsets = [0, 0], sizes = [1, 16], strides = [1, 1]} : vector<4x16xf32> to vector<1x16xf32>
    %11 = vector.extract_strided_slice %5 {offsets = [0, 0], sizes = [16, 8], strides = [1, 1]} : vector<16x16xbf16> to vector<16x8xbf16>
    %12 = vector.broadcast %9 : vector<16x1xf32> to vector<16x16xf32>
    %13 = vector.broadcast %10 : vector<1x16xf32> to vector<16x16xf32>
    %14 = arith.addf %12, %13 : vector<16x16xf32>
    %cst_8 = arith.constant 0.00999999977 : f32
    %15 = vector.broadcast %cst_8 : f32 to vector<16x16xf32>
    %16 = arith.mulf %15, %14 : vector<16x16xf32>
    %17 = arith.maximumf %14, %16 : vector<16x16xf32>
    %18 = arith.addf %17, %0 : vector<16x16xf32>
    %cst_9 = arith.constant dense<0xFF800000> : vector<16xf32>
    %19 = vector.multi_reduction <maximumf>, %18, %cst_9 [1] : vector<16x16xf32> to vector<16xf32>
    %20 = vector.shape_cast %19 : vector<16xf32> to vector<16x1xf32>
    %21 = vector.broadcast %20 : vector<16x1xf32> to vector<16x16xf32>
    %22 = arith.subf %18, %21 : vector<16x16xf32>
    %23 = math.exp %22 : vector<16x16xf32>
    %cst_10 = arith.constant dense<0.000000e+00> : vector<16xf32>
    %24 = vector.multi_reduction <add>, %23, %cst_10 [1] : vector<16x16xf32> to vector<16xf32>
    %25 = vector.shape_cast %24 : vector<16xf32> to vector<16x1xf32>
    %26 = arith.truncf %23 : vector<16x16xf32> to vector<16x16xbf16>
    %cst_11 = arith.constant dense<0.000000e+00> : vector<16x8xf32>
    %27 = tpu.matmul %26, %11, %cst_11 {dimension_numbers = #tpu.dot_dimension_numbers<[1], [0], [0], [1], [0, 0, 1, 1], [], []>} : vector<16x16xbf16>, vector<16x8xbf16>, vector<16x8xf32> -> vector<16x8xf32>
    %28 = tpu.reciprocal %25 {approx = true} : vector<16x1xf32> -> vector<16x1xf32>
    %29 = vector.broadcast %28 : vector<16x1xf32> to vector<16x8xf32>
    %30 = arith.mulf %27, %29 : vector<16x8xf32>
    %31 = vector.extract_strided_slice %7 {offsets = [0, 3], sizes = [16, 1], strides = [1, 1]} : vector<16x4xf32> to vector<16x1xf32>
    %32 = vector.extract_strided_slice %8 {offsets = [2, 0], sizes = [1, 16], strides = [1, 1]} : vector<4x16xf32> to vector<1x16xf32>
    %33 = vector.extract_strided_slice %5 {offsets = [0, 8], sizes = [16, 8], strides = [1, 1]} : vector<16x16xbf16> to vector<16x8xbf16>
    %34 = vector.broadcast %31 : vector<16x1xf32> to vector<16x16xf32>
    %35 = vector.broadcast %32 : vector<1x16xf32> to vector<16x16xf32>
    %36 = arith.addf %34, %35 : vector<16x16xf32>
    %cst_12 = arith.constant 0.00999999977 : f32
    %37 = vector.broadcast %cst_12 : f32 to vector<16x16xf32>
    %38 = arith.mulf %37, %36 : vector<16x16xf32>
    %39 = arith.maximumf %36, %38 : vector<16x16xf32>
    %40 = arith.addf %39, %0 : vector<16x16xf32>
    %cst_13 = arith.constant dense<0xFF800000> : vector<16xf32>
    %41 = vector.multi_reduction <maximumf>, %40, %cst_13 [1] : vector<16x16xf32> to vector<16xf32>
    %42 = vector.shape_cast %41 : vector<16xf32> to vector<16x1xf32>
    %43 = vector.broadcast %42 : vector<16x1xf32> to vector<16x16xf32>
    %44 = arith.subf %40, %43 : vector<16x16xf32>
    %45 = math.exp %44 : vector<16x16xf32>
    %cst_14 = arith.constant dense<0.000000e+00> : vector<16xf32>
    %46 = vector.multi_reduction <add>, %45, %cst_14 [1] : vector<16x16xf32> to vector<16xf32>
    %47 = vector.shape_cast %46 : vector<16xf32> to vector<16x1xf32>
    %48 = arith.truncf %45 : vector<16x16xf32> to vector<16x16xbf16>
    %cst_15 = arith.constant dense<0.000000e+00> : vector<16x8xf32>
    %49 = tpu.matmul %48, %33, %cst_15 {dimension_numbers = #tpu.dot_dimension_numbers<[1], [0], [0], [1], [0, 0, 1, 1], [], []>} : vector<16x16xbf16>, vector<16x8xbf16>, vector<16x8xf32> -> vector<16x8xf32>
    %50 = tpu.reciprocal %47 {approx = true} : vector<16x1xf32> -> vector<16x1xf32>
    %51 = vector.broadcast %50 : vector<16x1xf32> to vector<16x8xf32>
    %52 = arith.mulf %49, %51 : vector<16x8xf32>
    %53 = tpu.concatenate %30, %52 in 1 : vector<16x8xf32>, vector<16x8xf32> -> vector<16x16xf32>
    %cst_16 = arith.constant 0.000000e+00 : f32
    %54 = vector.broadcast %cst_16 : f32 to vector<16x16xf32>
    %55 = arith.cmpf ogt, %53, %54 : vector<16x16xf32>
    %56 = math.exp %53 : vector<16x16xf32>
    %cst_17 = arith.constant 1.000000e+00 : f32
    %57 = vector.broadcast %cst_17 : f32 to vector<16x16xf32>
    %58 = arith.subf %56, %57 : vector<16x16xf32>
    %59 = arith.select %55, %53, %58 : vector<16x16xi1>, vector<16x16xf32>
    %60 = arith.truncf %59 : vector<16x16xf32> to vector<16x16xbf16>
    %c0_18 = arith.constant 0 : index
    %c0_19 = arith.constant 0 : index
    %61 = vector.load %arg4[%c0_18, %c0_19] : memref<16x8xbf16, #tpu.memory_space<vmem>>, vector<16x8xbf16>
    %cst_20 = arith.constant dense<0.000000e+00> : vector<16x8xf32>
    %62 = tpu.matmul %60, %61, %cst_20 {dimension_numbers = #tpu.dot_dimension_numbers<[1], [0], [0], [1], [0, 0, 1, 1], [], []>} : vector<16x16xbf16>, vector<16x8xbf16>, vector<16x8xf32> -> vector<16x8xf32>
    %63 = arith.truncf %62 : vector<16x8xf32> to vector<16x8xbf16>
    %c0_21 = arith.constant 0 : index
    %c0_22 = arith.constant 0 : index
    %64 = vector.load %arg5[%c0_21, %c0_22] : memref<8x2xbf16, #tpu.memory_space<vmem>>, vector<8x2xbf16>
    %cst_23 = arith.constant dense<0.000000e+00> : vector<16x2xf32>
    %65 = tpu.matmul %63, %64, %cst_23 {dimension_numbers = #tpu.dot_dimension_numbers<[1], [0], [0], [1], [0, 0, 1, 1], [], []>} : vector<16x8xbf16>, vector<8x2xbf16>, vector<16x2xf32> -> vector<16x2xf32>
    %66 = tpu.transpose %65, [1, 0] : vector<16x2xf32> -> vector<2x16xf32>
    %67 = vector.extract_strided_slice %65 {offsets = [0, 1], sizes = [16, 1], strides = [1, 1]} : vector<16x2xf32> to vector<16x1xf32>
    %68 = vector.extract_strided_slice %66 {offsets = [0, 0], sizes = [1, 16], strides = [1, 1]} : vector<2x16xf32> to vector<1x16xf32>
    %69 = vector.broadcast %67 : vector<16x1xf32> to vector<16x16xf32>
    %70 = vector.broadcast %68 : vector<1x16xf32> to vector<16x16xf32>
    %71 = arith.addf %69, %70 : vector<16x16xf32>
    %cst_24 = arith.constant 0.00999999977 : f32
    %72 = vector.broadcast %cst_24 : f32 to vector<16x16xf32>
    %73 = arith.mulf %72, %71 : vector<16x16xf32>
    %74 = arith.maximumf %71, %73 : vector<16x16xf32>
    %75 = arith.addf %74, %0 : vector<16x16xf32>
    %cst_25 = arith.constant dense<0xFF800000> : vector<16xf32>
    %76 = vector.multi_reduction <maximumf>, %75, %cst_25 [1] : vector<16x16xf32> to vector<16xf32>
    %77 = vector.shape_cast %76 : vector<16xf32> to vector<16x1xf32>
    %78 = vector.broadcast %77 : vector<16x1xf32> to vector<16x16xf32>
    %79 = arith.subf %75, %78 : vector<16x16xf32>
    %80 = math.exp %79 : vector<16x16xf32>
    %cst_26 = arith.constant dense<0.000000e+00> : vector<16xf32>
    %81 = vector.multi_reduction <add>, %80, %cst_26 [1] : vector<16x16xf32> to vector<16xf32>
    %82 = vector.shape_cast %81 : vector<16xf32> to vector<16x1xf32>
    %83 = arith.truncf %80 : vector<16x16xf32> to vector<16x16xbf16>
    %cst_27 = arith.constant dense<0.000000e+00> : vector<16x8xf32>
    %84 = tpu.matmul %83, %63, %cst_27 {dimension_numbers = #tpu.dot_dimension_numbers<[1], [0], [0], [1], [0, 0, 1, 1], [], []>} : vector<16x16xbf16>, vector<16x8xbf16>, vector<16x8xf32> -> vector<16x8xf32>
    %85 = tpu.reciprocal %82 {approx = true} : vector<16x1xf32> -> vector<16x1xf32>
    %86 = vector.broadcast %85 : vector<16x1xf32> to vector<16x8xf32>
    %87 = arith.mulf %84, %86 : vector<16x8xf32>
    %88 = arith.truncf %87 : vector<16x8xf32> to vector<16x8xbf16>
    %c0_28 = arith.constant 0 : index
    %c0_29 = arith.constant 0 : index
    %89 = vector.load %arg6[%c0_28, %c0_29] : memref<8x128xbf16, #tpu.memory_space<vmem>>, vector<8x128xbf16>
    %cst_30 = arith.constant dense<0.000000e+00> : vector<16x128xf32>
    %90 = tpu.matmul %88, %89, %cst_30 {dimension_numbers = #tpu.dot_dimension_numbers<[1], [0], [0], [1], [0, 0, 1, 1], [], []>} : vector<16x8xbf16>, vector<8x128xbf16>, vector<16x128xf32> -> vector<16x128xf32>
    %c0_31 = arith.constant 0 : index
    %c0_32 = arith.constant 0 : index
    %91 = vector.load %arg7[%c0_31, %c0_32] : memref<1x128xf32, #tpu.memory_space<vmem>>, vector<1x128xf32>
    %92 = vector.broadcast %91 : vector<1x128xf32> to vector<16x128xf32>
    %93 = arith.addf %90, %92 : vector<16x128xf32>
    %c0_33 = arith.constant 0 : index
    %c0_34 = arith.constant 0 : index
    %94 = vector.load %arg8[%c0_33, %c0_34] : memref<16x128xf32, #tpu.memory_space<vmem>>, vector<16x128xf32>
    tpu.vector_store %arg8[%c0_33, %c0_34], %93 {strides = array<i32>} : memref<16x128xf32, #tpu.memory_space<vmem>>, vector<16x128xf32>,
    return
  }
}

</mosaic_0001>

<llo_original>
// kernel: gat_forward.1
$region0: #{gat_forward.1}
  #allocation0 [shape = 'u32[]', space=smem, size = 0x4, offset = 0x4, fixed_abs, tag = 'smem constant byte address 0x4 - core index']
  #allocation1 [shape = 'u32[72,128]{1,0:T(1,128)}', space=vmem, size = 0x9000, scoped, tag = 'internal scratch']
  %s0 = inlined_call_operand.vmem [shape: f32[16,16], index: 0, kind: input, shape index: {}]
  %s1 = inlined_call_operand.vmem [shape: f32[16,16], index: 1, kind: input, shape index: {}]
  %s2 = inlined_call_operand.vmem [shape: bf16[16,16], index: 2, kind: input, shape index: {}]
  %s3 = inlined_call_operand.vmem [shape: bf16[16,4], index: 3, kind: input, shape index: {}]
  %s4 = inlined_call_operand.vmem [shape: bf16[16,8], index: 4, kind: input, shape index: {}]
  %s5 = inlined_call_operand.vmem [shape: bf16[8,2], index: 5, kind: input, shape index: {}]
  %s6 = inlined_call_operand.vmem [shape: bf16[8,128], index: 6, kind: input, shape index: {}]
  %s7 = inlined_call_operand.vmem [shape: f32[1,128], index: 7, kind: input, shape index: {}]
  %s8 = inlined_call_operand.vmem [shape: f32[16,128], index: 8, kind: output, shape index: {}]
  %s9 = sld [smem:[#allocation0]]
  $region42: #{gat_forward.1} parent=0
    _
  %s11 = ssub.s32 1, %s9
  %s12 = scalar_select 0, %s11, %s9
  // Predicated region
  $region2: #{gat_forward.1} parent=0 // pred_check
    _
  $region3: #{gat_forward.1} parent=0 // pred_check_branch
    %14 = sbr.rel (0) target = $region5
  $region4: #{gat_forward.1} parent=0 // pred_region
    _
  $region5: #{gat_forward.1} parent=0 // pred_fallthru
    _
  // Predicated region
  $region6: #{gat_forward.1} parent=0 // pred_check
    _
  $region7: #{gat_forward.1} parent=0 // pred_check_branch
    %16 = sbr.rel (0) target = $region9
  $region8: #{gat_forward.1} parent=0 // pred_region
    _
  $region9: #{gat_forward.1} parent=0 // pred_fallthru
    _
  // Predicated region
  $region10: #{gat_forward.1} parent=0 // pred_check
    _
  $region11: #{gat_forward.1} parent=0 // pred_check_branch
    %18 = sbr.rel (0) target = $region13
  $region12: #{gat_forward.1} parent=0 // pred_region
    _
  $region13: #{gat_forward.1} parent=0 // pred_fallthru
    _
  // Predicated region
  $region14: #{gat_forward.1} parent=0 // pred_check
    _
  $region15: #{gat_forward.1} parent=0 // pred_check_branch
    %20 = sbr.rel (0) target = $region17
  $region16: #{gat_forward.1} parent=0 // pred_region
    _
  $region17: #{gat_forward.1} parent=0 // pred_fallthru
    _
  // Predicated region
  $region18: #{gat_forward.1} parent=0 // pred_check
    _
  $region19: #{gat_forward.1} parent=0 // pred_check_branch
    %22 = sbr.rel (0) target = $region21
  $region20: #{gat_forward.1} parent=0 // pred_region
    _
  $region21: #{gat_forward.1} parent=0 // pred_fallthru
    _
  // Predicated region
  $region22: #{gat_forward.1} parent=0 // pred_check
    _
  $region23: #{gat_forward.1} parent=0 // pred_check_branch
    %24 = sbr.rel (0) target = $region25
  $region24: #{gat_forward.1} parent=0 // pred_region
    _
  $region25: #{gat_forward.1} parent=0 // pred_fallthru
    _
  // Predicated region
  $region26: #{gat_forward.1} parent=0 // pred_check
    _
  $region27: #{gat_forward.1} parent=0 // pred_check_branch
    %26 = sbr.rel (0) target = $region29
  $region28: #{gat_forward.1} parent=0 // pred_region
    _
  $region29: #{gat_forward.1} parent=0 // pred_fallthru
    _
  // Predicated region
  $region30: #{gat_forward.1} parent=0 // pred_check
    _
  $region31: #{gat_forward.1} parent=0 // pred_check_branch
    %28 = sbr.rel (0) target = $region33
  $region32: #{gat_forward.1} parent=0 // pred_region
    _
  $region33: #{gat_forward.1} parent=0 // pred_fallthru
    _
  %v30 = vld [vmem:[%s1] sm:$0xff]
  %v31 = vld [vmem:[%s1 + $0x8] sm:$0xff]
  %v32 = vld [vmem:[%s0] sm:$0xff]
  %v33 = vld [vmem:[%s0 + $0x8] sm:$0xff]
  %v34 = vpack.c.bf16 %v33, %v32
  %v35 = vld [vmem:[%s2] sm:$0xf]
  %v36 = vld [vmem:[%s2 + $0x4] sm:$0xf]
  %v39 = vunpack.c.l.b16 %v35
  %v40 = vunpack.c.l.b16 %v36
  %v41 = vpack.c.b16 %v40, %v39
  %vm43 = vcmask 130048
  %v45 = vsel %vm43, %v34, 0
  %47 = vmatpush.bf16.msra.mxu0 0
  %48 = vmatpush.bf16.msra.mxu0 0
  %49 = vmatpush.bf16.msra.mxu0 0
  %50 = vmatpush.bf16.msra.mxu0 0
  %51 = vmatpush.bf16.msra.mxu0 0
  %52 = vmatpush.bf16.msra.mxu0 0
  %53 = vmatpush.bf16.msra.mxu0 0
  %54 = vmatpush.bf16.msra.mxu0 %v41
  %55 = vmatmul.bf16.gmra.mxu0 %v45
  %v56 = vpop.f32.mrf.mxu0
  %v57 = vadd.f32 0.0, %v56
  %v58 = vpop.f32.mrf.mxu0
  %v59 = vadd.f32 0.0, %v58
  %60 = vdwg.mxu0
  %v61 = vpack.c.bf16 %v57, %v57
  %v62 = vpack.c.bf16 %v59, %v59
  %v63 = vld [vmem:[%s3] sm:$0xf]
  %v64 = vld [vmem:[%s3 + $0x4] sm:$0xf]
  %v67 = vunpack.c.l.b16 %v61
  %v68 = vunpack.c.l.b16 %v62
  %v69 = vpack.c.b16 %v68, %v67
  %v72 = vunpack.c.l.b16 %v63
  %v73 = vunpack.c.l.b16 %v64
  %v74 = vpack.c.b16 %v73, %v72
  %v77 = vsel %vm43, %v69, 0
  %79 = vmatpush.bf16.msra.mxu0 0
  %80 = vmatpush.bf16.msra.mxu0 0
  %81 = vmatpush.bf16.msra.mxu0 0
  %82 = vmatpush.bf16.msra.mxu0 0
  %83 = vmatpush.bf16.msra.mxu0 0
  %84 = vmatpush.bf16.msra.mxu0 0
  %85 = vmatpush.bf16.msra.mxu0 0
  %86 = vmatpush.bf16.msra.mxu0 %v74
  %87 = vmatmul.bf16.gmra.mxu0 %v77
  %v88 = vpop.f32.mrf.mxu0
  %v89 = vadd.f32 0.0, %v88
  %v90 = vpop.f32.mrf.mxu0
  %v91 = vadd.f32 0.0, %v90
  %92 = vdwg.mxu0
  %93 = vxpose.xlu0.b32.start [1/16] %v89, 128
  %94 = vxpose.xlu0.b32.cont [2/16] %v91, 128
  %95 = vxpose.xlu0.b32.cont [3/16] 0.0, 128
  %96 = vxpose.xlu0.b32.cont [4/16] 0.0, 128
  %97 = vxpose.xlu0.b32.cont [5/16] 0.0, 128
  %98 = vxpose.xlu0.b32.cont [6/16] 0.0, 128
  %99 = vxpose.xlu0.b32.cont [7/16] 0.0, 128
  %100 = vxpose.xlu0.b32.cont [8/16] 0.0, 128
  %101 = vxpose.xlu0.b32.cont [9/16] 0.0, 128
  %102 = vxpose.xlu0.b32.cont [10/16] 0.0, 128
  %103 = vxpose.xlu0.b32.cont [11/16] 0.0, 128
  %104 = vxpose.xlu0.b32.cont [12/16] 0.0, 128
  %105 = vxpose.xlu0.b32.cont [13/16] 0.0, 128
  %106 = vxpose.xlu0.b32.cont [14/16] 0.0, 128
  %107 = vxpose.xlu0.b32.cont [15/16] 0.0, 128
  %108 = vxpose.xlu0.b32.end [16/16] 0.0, 128
  %v109 = vpop.trf.xlu0
  %v110 = vpop.trf.xlu0
  %v111 = vpop.trf.xlu0
  %v112 = vpop.trf.xlu0
  %v113 = vpop.trf.xlu0
  %v114 = vpop.trf.xlu0
  %v115 = vpop.trf.xlu0
  %v116 = vpop.trf.xlu0
  %v117 = vpop.trf.xlu0
  %v118 = vpop.trf.xlu0
  %v119 = vpop.trf.xlu0
  %v120 = vpop.trf.xlu0
  %v121 = vpop.trf.xlu0
  %v122 = vpop.trf.xlu0
  %v123 = vpop.trf.xlu0
  %v124 = vpop.trf.xlu0
  %126 = vset.pattern.permute.xlu0 1
  %127 = vperm.xlu0 %126, %v89
  %v128 = vpop.permute.xlu0 %127
  %131 = vset.pattern.permute.xlu0 1
  %132 = vperm.xlu0 %131, %v91
  %v133 = vpop.permute.xlu0 %132
  %v135 = vperm.slane %v109, 0
  %v136 = vadd.f32 %v128, %v135
  %v137 = vadd.f32 %v133, %v135
  %v138 = vmul.f32 %v136, 0.01
  %v139 = vmul.f32 %v137, 0.01
  %v140 = vmax.f32 %v136, %v138
  %v141 = vmax.f32 %v137, %v139
  %v142 = vadd.f32 %v140, %v30
  %v143 = vadd.f32 %v141, %v31
  %v144 = vsel %vm43, %v142, -inf
  %145 = vmax.xlane.f32.xlu0 %v144
  %v146 = vpop.xlane.xlu0 %145
  %v147 = vsel %vm43, %v143, -inf
  %148 = vmax.xlane.f32.xlu0 %v147
  %v149 = vpop.xlane.xlu0 %148
  %v150 = vsub.f32 %v142, %v146
  %v151 = vsub.f32 %v143, %v149
  %v152 = vmul.f32 %v150, 1.442695
  %v153 = vpow.pop %v152
  %v154 = vmul.f32 %v151, 1.442695
  %v155 = vpow.pop %v154
  %v156 = vsel %vm43, %v153, 0.0
  %157 = vadd.xlane.f32.xlu0 %v156
  %v158 = vpop.xlane.xlu0 %157
  %v159 = vsel %vm43, %v155, 0.0
  %160 = vadd.xlane.f32.xlu0 %v159
  %v161 = vpop.xlane.xlu0 %160
  %v162 = vpack.c.bf16 %v155, %v153
  %v165 = vsel %vm43, %v162, 0
  %167 = vmatpush.bf16.msra.mxu0 0
  %168 = vmatpush.bf16.msra.mxu0 0
  %169 = vmatpush.bf16.msra.mxu0 0
  %170 = vmatpush.bf16.msra.mxu0 0
  %171 = vmatpush.bf16.msra.mxu0 0
  %172 = vmatpush.bf16.msra.mxu0 0
  %173 = vmatpush.bf16.msra.mxu0 0
  %174 = vmatpush.bf16.msra.mxu0 %v69
  %175 = vmatmul.bf16.gmra.mxu0 %v165
  %v176 = vpop.f32.mrf.mxu0
  %v177 = vadd.f32 0.0, %v176
  %v178 = vpop.f32.mrf.mxu0
  %v179 = vadd.f32 0.0, %v178
  %180 = vdwg.mxu0
  %v181 = vrcp.pop %v158
  %v182 = vrcp.pop %v161
  %v183 = vmul.f32 %v177, %v181
  %v184 = vmul.f32 %v179, %v182
  %185 = vset.pattern.permute.xlu0 3
  %186 = vperm.xlu0 %185, %v89
  %v187 = vpop.permute.xlu0 %186
  %189 = vset.pattern.permute.xlu0 3
  %190 = vperm.xlu0 %189, %v91
  %v191 = vpop.permute.xlu0 %190
  %v193 = vperm.slane %v109, 2
  %v194 = vadd.f32 %v187, %v193
  %v195 = vadd.f32 %v191, %v193
  %v196 = vmul.f32 %v194, 0.01
  %v197 = vmul.f32 %v195, 0.01
  %v198 = vmax.f32 %v194, %v196
  %v199 = vmax.f32 %v195, %v197
  %v200 = vadd.f32 %v198, %v30
  %v201 = vadd.f32 %v199, %v31
  %v202 = vsel %vm43, %v200, -inf
  %203 = vmax.xlane.f32.xlu0 %v202
  %v204 = vpop.xlane.xlu0 %203
  %v205 = vsel %vm43, %v201, -inf
  %206 = vmax.xlane.f32.xlu0 %v205
  %v207 = vpop.xlane.xlu0 %206
  %v208 = vsub.f32 %v200, %v204
  %v209 = vsub.f32 %v201, %v207
  %v210 = vmul.f32 %v208, 1.442695
  %v211 = vpow.pop %v210
  %v212 = vmul.f32 %v209, 1.442695
  %v213 = vpow.pop %v212
  %v214 = vsel %vm43, %v211, 0.0
  %215 = vadd.xlane.f32.xlu0 %v214
  %v216 = vpop.xlane.xlu0 %215
  %v217 = vsel %vm43, %v213, 0.0
  %218 = vadd.xlane.f32.xlu0 %v217
  %v219 = vpop.xlane.xlu0 %218
  %v220 = vpack.c.bf16 %v213, %v211
  %221 = vrot.lane.b32.xlu0 %v69, 120
  %v222 = vpop.permute.xlu0 %221
  %v225 = vsel %vm43, %v220, 0
  %227 = vmatpush.bf16.msra.mxu0 0
  %228 = vmatpush.bf16.msra.mxu0 0
  %229 = vmatpush.bf16.msra.mxu0 0
  %230 = vmatpush.bf16.msra.mxu0 0
  %231 = vmatpush.bf16.msra.mxu0 0
  %232 = vmatpush.bf16.msra.mxu0 0
  %233 = vmatpush.bf16.msra.mxu0 0
  %234 = vmatpush.bf16.msra.mxu0 %v222
  %235 = vmatmul.bf16.gmra.mxu0 %v225
  %v236 = vpop.f32.mrf.mxu0
  %v237 = vadd.f32 0.0, %v236
  %v238 = vpop.f32.mrf.mxu0
  %v239 = vadd.f32 0.0, %v238
  %240 = vdwg.mxu0
  %v241 = vrcp.pop %v216
  %v242 = vrcp.pop %v219
  %v243 = vmul.f32 %v237, %v241
  %v244 = vmul.f32 %v239, %v242
  %247 = vrot.lane.b32.xlu0 %v243, 8
  %v248 = vpop.permute.xlu0 %247
  %249 = vrot.lane.b32.xlu0 %v244, 8
  %v250 = vpop.permute.xlu0 %249
  %vm253 = vcmask 64512
  %v254 = vsel %vm253, %v183, %v248
  %v255 = vsel %vm253, %v184, %v250
  %vm256 = vcmp.gt.f32.partialorder %v254, 0.0
  %vm257 = vcmp.gt.f32.partialorder %v255, 0.0
  %v258 = vmul.f32 %v254, 1.442695
  %v259 = vpow.pop %v258
  %v260 = vmul.f32 %v255, 1.442695
  %v261 = vpow.pop %v260
  %v262 = vsub.f32 %v259, 1.0
  %v263 = vsub.f32 %v261, 1.0
  %v264 = vsel %vm256, %v254, %v262
  %v265 = vsel %vm257, %v255, %v263
  %v266 = vpack.c.bf16 %v265, %v264
  %v267 = vld [vmem:[%s4] sm:$0xf]
  %v268 = vld [vmem:[%s4 + $0x4] sm:$0xf]
  %v271 = vunpack.c.l.b16 %v267
  %v272 = vunpack.c.l.b16 %v268
  %v273 = vpack.c.b16 %v272, %v271
  %v276 = vsel %vm43, %v266, 0
  %278 = vmatpush.bf16.msra.mxu0 0
  %279 = vmatpush.bf16.msra.mxu0 0
  %280 = vmatpush.bf16.msra.mxu0 0
  %281 = vmatpush.bf16.msra.mxu0 0
  %282 = vmatpush.bf16.msra.mxu0 0
  %283 = vmatpush.bf16.msra.mxu0 0
  %284 = vmatpush.bf16.msra.mxu0 0
  %285 = vmatpush.bf16.msra.mxu0 %v273
  %286 = vmatmul.bf16.gmra.mxu0 %v276
  %v287 = vpop.f32.mrf.mxu0
  %v288 = vadd.f32 0.0, %v287
  %v289 = vpop.f32.mrf.mxu0
  %v290 = vadd.f32 0.0, %v289
  %291 = vdwg.mxu0
  %v292 = vpack.c.bf16 %v290, %v288
  %v293 = vld [vmem:[%s5] sm:$0xf]
  %v295 = vsel %vm253, %v292, 0
  %vm297 = vcmask 1043456
  %v299 = vsel %vm297, %v293, 0
  %301 = vmatpush.bf16.msra.mxu0 0
  %302 = vmatpush.bf16.msra.mxu0 0
  %303 = vmatpush.bf16.msra.mxu0 0
  %304 = vmatpush.bf16.msra.mxu0 0
  %305 = vmatpush.bf16.msra.mxu0 0
  %306 = vmatpush.bf16.msra.mxu0 0
  %307 = vmatpush.bf16.msra.mxu0 0
  %308 = vmatpush.bf16.msra.mxu0 %v299
  %309 = vmatmul.bf16.gmra.mxu0 %v295
  %v310 = vpop.f32.mrf.mxu0
  %v311 = vadd.f32 0.0, %v310
  %v312 = vpop.f32.mrf.mxu0
  %v313 = vadd.f32 0.0, %v312
  %314 = vdwg.mxu0
  %315 = vxpose.xlu0.b32.start [1/16] %v311, 128
  %316 = vxpose.xlu0.b32.cont [2/16] %v313, 128
  %317 = vxpose.xlu0.b32.cont [3/16] 0.0, 128
  %318 = vxpose.xlu0.b32.cont [4/16] 0.0, 128
  %319 = vxpose.xlu0.b32.cont [5/16] 0.0, 128
  %320 = vxpose.xlu0.b32.cont [6/16] 0.0, 128
  %321 = vxpose.xlu0.b32.cont [7/16] 0.0, 128
  %322 = vxpose.xlu0.b32.cont [8/16] 0.0, 128
  %323 = vxpose.xlu0.b32.cont [9/16] 0.0, 128
  %324 = vxpose.xlu0.b32.cont [10/16] 0.0, 128
  %325 = vxpose.xlu0.b32.cont [11/16] 0.0, 128
  %326 = vxpose.xlu0.b32.cont [12/16] 0.0, 128
  %327 = vxpose.xlu0.b32.cont [13/16] 0.0, 128
  %328 = vxpose.xlu0.b32.cont [14/16] 0.0, 128
  %329 = vxpose.xlu0.b32.cont [15/16] 0.0, 128
  %330 = vxpose.xlu0.b32.end [16/16] 0.0, 128
  %v331 = vpop.trf.xlu0
  %v332 = vpop.trf.xlu0
  %v333 = vpop.trf.xlu0
  %v334 = vpop.trf.xlu0
  %v335 = vpop.trf.xlu0
  %v336 = vpop.trf.xlu0
  %v337 = vpop.trf.xlu0
  %v338 = vpop.trf.xlu0
  %v339 = vpop.trf.xlu0
  %v340 = vpop.trf.xlu0
  %v341 = vpop.trf.xlu0
  %v342 = vpop.trf.xlu0
  %v343 = vpop.trf.xlu0
  %v344 = vpop.trf.xlu0
  %v345 = vpop.trf.xlu0
  %v346 = vpop.trf.xlu0
  %348 = vset.pattern.permute.xlu0 1
  %349 = vperm.xlu0 %348, %v311
  %v350 = vpop.permute.xlu0 %349
  %353 = vset.pattern.permute.xlu0 1
  %354 = vperm.xlu0 %353, %v313
  %v355 = vpop.permute.xlu0 %354
  %v357 = vperm.slane %v331, 0
  %v358 = vadd.f32 %v350, %v357
  %v359 = vadd.f32 %v355, %v357
  %v360 = vmul.f32 %v358, 0.01
  %v361 = vmul.f32 %v359, 0.01
  %v362 = vmax.f32 %v358, %v360
  %v363 = vmax.f32 %v359, %v361
  %v364 = vadd.f32 %v362, %v30
  %v365 = vadd.f32 %v363, %v31
  %v366 = vsel %vm43, %v364, -inf
  %367 = vmax.xlane.f32.xlu0 %v366
  %v368 = vpop.xlane.xlu0 %367
  %v369 = vsel %vm43, %v365, -inf
  %370 = vmax.xlane.f32.xlu0 %v369
  %v371 = vpop.xlane.xlu0 %370
  %v372 = vsub.f32 %v364, %v368
  %v373 = vsub.f32 %v365, %v371
  %v374 = vmul.f32 %v372, 1.442695
  %v375 = vpow.pop %v374
  %v376 = vmul.f32 %v373, 1.442695
  %v377 = vpow.pop %v376
  %v378 = vsel %vm43, %v375, 0.0
  %379 = vadd.xlane.f32.xlu0 %v378
  %v380 = vpop.xlane.xlu0 %379
  %v381 = vsel %vm43, %v377, 0.0
  %382 = vadd.xlane.f32.xlu0 %v381
  %v383 = vpop.xlane.xlu0 %382
  %v384 = vpack.c.bf16 %v377, %v375
  %v386 = vsel %vm43, %v384, 0
  %388 = vmatpush.bf16.msra.mxu0 0
  %389 = vmatpush.bf16.msra.mxu0 0
  %390 = vmatpush.bf16.msra.mxu0 0
  %391 = vmatpush.bf16.msra.mxu0 0
  %392 = vmatpush.bf16.msra.mxu0 0
  %393 = vmatpush.bf16.msra.mxu0 0
  %394 = vmatpush.bf16.msra.mxu0 0
  %395 = vmatpush.bf16.msra.mxu0 %v292
  %396 = vmatmul.bf16.gmra.mxu0 %v386
  %v397 = vpop.f32.mrf.mxu0
  %v398 = vadd.f32 0.0, %v397
  %v399 = vpop.f32.mrf.mxu0
  %v400 = vadd.f32 0.0, %v399
  %401 = vdwg.mxu0
  %v402 = vrcp.pop %v380
  %v403 = vrcp.pop %v383
  %v404 = vmul.f32 %v398, %v402
  %v405 = vmul.f32 %v400, %v403
  %v406 = vpack.c.bf16 %v405, %v404
  %v407 = vld [vmem:[%s6] sm:$0xf]
  %v408 = vld [vmem:[%s7] sm:$0x1]
  %v410 = vperm.slane %v408, 0
  %v413 = vsel %vm253, %v406, 0
  %v416 = vsel %vm297, %v407, 0
  %418 = vmatpush.bf16.msra.mxu0 0
  %419 = vmatpush.bf16.msra.mxu0 0
  %420 = vmatpush.bf16.msra.mxu0 0
  %421 = vmatpush.bf16.msra.mxu0 0
  %422 = vmatpush.bf16.msra.mxu0 0
  %423 = vmatpush.bf16.msra.mxu0 0
  %424 = vmatpush.bf16.msra.mxu0 0
  %425 = vmatpush.bf16.msra.mxu0 %v416
  %426 = vmatmul.bf16.gmra.mxu0 %v413
  %v427 = vpop.f32.mrf.mxu0
  %v428 = vadd.f32 %v410, %v427
  %v429 = vpop.f32.mrf.mxu0
  %v430 = vadd.f32 %v410, %v429
  %431 = vdwg.mxu0
  %432 = vst [vmem:[%s8] sm:$0xff] %v428
  %433 = vst [vmem:[%s8 + $0x8] sm:$0xff] %v430
  // Predicated region
  $region34: #{gat_forward.1} parent=0 // pred_check
    _
  $region35: #{gat_forward.1} parent=0 // pred_check_branch
    %435 = sbr.rel (0) target = $region37
  $region36: #{gat_forward.1} parent=0 // pred_region
    _
  $region37: #{gat_forward.1} parent=0 // pred_fallthru
    _
  // Predicated region
  $region38: #{gat_forward.1} parent=0 // pred_check
    _
  $region39: #{gat_forward.1} parent=0 // pred_check_branch
    %437 = sbr.rel (0) target = $region41
  $region40: #{gat_forward.1} parent=0 // pred_region
    _
  $region41: #{gat_forward.1} parent=0 // pred_fallthru
    _

</llo_original>
